<compile_context>
chip_gen: v7x
topology: tpu7x:2x2x1
jax: 0.10.0
libtpu: 0.0.40
codegen_flags: <defaults>
</compile_context>

<pallas_src>
import math

import jax
import jax.numpy as jnp
from jax.experimental import pallas as pl
from jax.experimental.pallas import tpu as pltpu


_INV_SQRT2 = 1.0 / math.sqrt(2.0)


def _gelu_exact(h):
    # torch.nn.GELU() default (erf form); transcendental sits on the EUP.
    return 0.5 * h * (1.0 + jax.lax.erf(h * _INV_SQRT2))


# ----------------------------- kernels --------------------------------------


def _ffn_kernel_resident(x_ref, w1_ref, b1_ref, w2_ref, b2_ref, o_ref):
    # Weights fully VMEM-resident: single fused pass, no accumulator needed.
    h = jnp.dot(x_ref[...], w1_ref[...], preferred_element_type=jnp.float32) + b1_ref[...]
    g = _gelu_exact(h)
    out = jnp.dot(g.astype(w2_ref.dtype), w2_ref[...], preferred_element_type=jnp.float32)
    o_ref[...] = (out + b2_ref[...]).astype(o_ref.dtype)


def _ffn_kernel_accum_out(x_ref, w1_ref, b1_ref, w2_ref, b2_ref, o_ref):
    # f32 output: accumulate ffn slabs directly into the resident output block
    # (saves a tm*hidden*4 scratch buffer).
    j = pl.program_id(1)

    @pl.when(j == 0)
    def _():
        o_ref[...] = jnp.broadcast_to(b2_ref[...], o_ref.shape)

    h = jnp.dot(x_ref[...], w1_ref[...], preferred_element_type=jnp.float32) + b1_ref[...]
    g = _gelu_exact(h)
    o_ref[...] += jnp.dot(g.astype(w2_ref.dtype), w2_ref[...],
                          preferred_element_type=jnp.float32)


def _ffn_kernel_accum_scratch(x_ref, w1_ref, b1_ref, w2_ref, b2_ref, o_ref, acc_ref):
    # Non-f32 output: keep an f32 accumulator, cast once at the last ffn slab.
    j = pl.program_id(1)

    @pl.when(j == 0)
    def _():
        acc_ref[...] = jnp.zeros_like(acc_ref)

    h = jnp.dot(x_ref[...], w1_ref[...], preferred_element_type=jnp.float32) + b1_ref[...]
    g = _gelu_exact(h)
    acc_ref[...] += jnp.dot(g.astype(w2_ref.dtype), w2_ref[...],
                            preferred_element_type=jnp.float32)

    @pl.when(j == pl.num_programs(1) - 1)
    def _():
        o_ref[...] = (acc_ref[...] + b2_ref[...]).astype(o_ref.dtype)


# --------------------------- tile selection ----------------------------------


def _round_up(x, n):
    return ((x + n - 1) // n) * n


def _tpu_vmem_capacity_bytes():
    try:
        cap = int(pltpu.get_tpu_info().vmem_capacity_bytes)
        if cap > 0:
            return cap
    except Exception:
        pass
    return 64 << 20  # conservative default (v7x per-TC VMEM)


def _row_tile_target(compute_dtype, vmem_cap):
    try:
        kind = jax.devices()[0].device_kind.lower()
    except Exception:
        kind = ""
    if ("v5" in kind and "lite" in kind) or "v5e" in kind:
        # v5e roofline knee ~240 flop/byte: 256-512 rows already hide the weight re-stream.
        return 512 if compute_dtype == jnp.bfloat16 else 256
    if vmem_cap <= (80 << 20):
        # 64-MiB-VMEM chips (v7x): keep tm >= 512, shrink tf first.
        return 512
    # 128-MiB VMEM (v6e-class): bf16 wants tm >= ~656 to hide the weight re-stream.
    return 1024 if compute_dtype == jnp.bfloat16 else 512


def _tile_footprint_bytes(tm, tf, grid_f, hidden, itemsize, out_itemsize, acc_row_bytes):
    w_bufs = 1 if grid_f == 1 else 2
    return (
        2 * tm * hidden * itemsize            # x tile (double-buffered)
        + 2 * tm * hidden * out_itemsize      # out tile (double-buffered)
        + tm * acc_row_bytes                  # f32 accumulator scratch (non-f32 out only)
        + w_bufs * hidden * tf * itemsize     # W1 slab(s)
        + w_bufs * tf * hidden * itemsize     # W2 slab(s)
        + w_bufs * tf * 4 + 2 * hidden * 4    # b1 slab(s) + b2
        + 2 * tm * tf * 4                     # f32 h / GELU(h) intermediates
    )


def _select_tiles(m, hidden, ffn_p, compute_dtype, out_dtype, vmem_budget, tm_target):
    itemsize = jnp.dtype(compute_dtype).itemsize
    out_itemsize = jnp.dtype(out_dtype).itemsize
    acc_row = 0 if out_dtype == jnp.float32 else 4 * hidden

    # ffn slab candidates, largest first; tf == ffn_p keeps the weights fully
    # resident (single-buffered, DMA'd exactly once across all row tiles).
    tf_cands = [ffn_p]
    for t in (4096, 2048, 1024, 512, 256, 128):
        if t < ffn_p and ffn_p % t == 0:
            tf_cands.append(t)

    # Cap the row tile so small inputs still give >= 2 grid steps (megacore).
    if m >= 16:
        tm_cap = max(8, _round_up(pl.cdiv(m, 2), 8))
    else:
        tm_cap = max(8, _round_up(m, 8))
    tm = max(8, min(tm_target, tm_cap))

    while True:
        for tf in tf_cands:
            fp = _tile_footprint_bytes(tm, tf, ffn_p // tf, hidden, itemsize,
                                       out_itemsize, acc_row)
            if fp <= vmem_budget:
                return tm, tf
        if tm <= 8:
            return 8, tf_cands[-1]
        tm = _round_up(max(8, tm // 2), 8)


# ------------------------------ wrapper ---------------------------------------


def feed_forward_network(x, w1, b1, w2, b2, *, block_rows=None, block_ffn=None,
                         use_bf16_matmul=False):
    """Fused Linear -> GELU(exact) -> Linear.

    x: (..., hidden). w1: (hidden, ffn), b1: (ffn,), w2: (ffn, hidden), b2: (hidden,)
    (weights are the transposes of torch.nn.Linear.weight). Set
    use_bf16_matmul=True for f32 inputs when ~1e-2 relative error is acceptable;
    accumulation and the GELU stay in f32 either way.
    """
    orig_shape = x.shape
    out_dtype = x.dtype
    hidden = orig_shape[-1]
    ffn = w1.shape[1]

    x2d = x.reshape(-1, hidden)
    m = x2d.shape[0]

    compute_dtype = jnp.bfloat16 if use_bf16_matmul else x2d.dtype
    x2d = x2d.astype(compute_dtype)
    w1 = w1.astype(compute_dtype)
    w2 = w2.astype(compute_dtype)
    b1_2d = b1.reshape(1, ffn).astype(jnp.float32)
    b2_2d = b2.reshape(1, hidden).astype(jnp.float32)

    # Pad the ffn axis to a multiple of 128: zero W1 cols / b1 entries / W2 rows
    # contribute nothing, and large ragged FFNs can still be streamed in slabs.
    ffn_p = _round_up(ffn, 128)
    if ffn_p != ffn:
        pad = ffn_p - ffn
        w1 = jnp.pad(w1, ((0, 0), (0, pad)))
        b1_2d = jnp.pad(b1_2d, ((0, 0), (0, pad)))
        w2 = jnp.pad(w2, ((0, pad), (0, 0)))

    itemsize = jnp.dtype(compute_dtype).itemsize
    out_itemsize = jnp.dtype(out_dtype).itemsize

    vmem_cap = _tpu_vmem_capacity_bytes()
    vmem_budget = max(16 << 20, int(vmem_cap * 0.82))  # headroom for compiler scratch

    tm_sel, tf_sel = _select_tiles(m, hidden, ffn_p, compute_dtype, out_dtype,
                                   vmem_budget,
                                   _row_tile_target(compute_dtype, vmem_cap))
    tm = tm_sel if block_rows is None else block_rows
    tf = tf_sel if block_ffn is None else block_ffn
    assert ffn_p % tf == 0, "block_ffn must divide the (128-padded) ffn_size"

    m_pad = _round_up(m, tm)
    if m_pad != m:
        x2d = jnp.pad(x2d, ((0, m_pad - m), (0, 0)))

    grid_m = m_pad // tm
    grid_f = ffn_p // tf

    acc_row = 0 if out_dtype == jnp.float32 else 4 * hidden
    footprint = _tile_footprint_bytes(tm, tf, grid_f, hidden, itemsize,
                                      out_itemsize, acc_row)
    vmem_limit = int(min(max(int(footprint * 1.2) + (2 << 20), 32 << 20),
                         int(vmem_cap * 0.9)))

    # HBM traffic: weights (+ b1) are re-streamed once per row tile when the ffn
    # axis is tiled; count it so XLA schedules against the right roofline.
    weight_passes = grid_m if grid_f > 1 else 1
    cost = pl.CostEstimate(
        flops=4 * m_pad * hidden * ffn_p + 8 * m_pad * ffn_p,
        transcendentals=m_pad * ffn_p,
        bytes_accessed=(m_pad * hidden * itemsize
                        + weight_passes * (hidden * ffn_p + ffn_p * hidden) * itemsize
                        + weight_passes * ffn_p * 4 + hidden * 4
                        + m_pad * hidden * out_itemsize),
    )

    if grid_f == 1:
        # Weights fully resident in VMEM: single-buffered, DMA'd exactly once.
        resident = pl.Buffered(1)
        grid = (grid_m,)
        in_specs = [
            pl.BlockSpec((tm, hidden), lambda i: (i, 0)),                      # x row tile
            pl.BlockSpec((hidden, tf), lambda i: (0, 0), pipeline_mode=resident),   # W1
            pl.BlockSpec((1, tf), lambda i: (0, 0), pipeline_mode=resident),        # b1
            pl.BlockSpec((tf, hidden), lambda i: (0, 0), pipeline_mode=resident),   # W2
            pl.BlockSpec((1, hidden), lambda i: (0, 0), pipeline_mode=resident),    # b2
        ]
        out_specs = pl.BlockSpec((tm, hidden), lambda i: (i, 0))
        kernel = _ffn_kernel_resident
        scratch_shapes = []
        dim_sem = ("parallel",)
    else:
        grid = (grid_m, grid_f)
        in_specs = [
            pl.BlockSpec((tm, hidden), lambda i, j: (i, 0)),                   # x row tile
            pl.BlockSpec((hidden, tf), lambda i, j: (0, j)),                   # W1 slab
            pl.BlockSpec((1, tf), lambda i, j: (0, j)),                        # b1 slab
            pl.BlockSpec((tf, hidden), lambda i, j: (j, 0)),                   # W2 slab
            pl.BlockSpec((1, hidden), lambda i, j: (0, 0),
                         pipeline_mode=pl.Buffered(1)),                        # b2
        ]
        out_specs = pl.BlockSpec((tm, hidden), lambda i, j: (i, 0))
        dim_sem = ("parallel", "arbitrary")
        if out_dtype == jnp.float32:
            kernel = _ffn_kernel_accum_out
            scratch_shapes = []
        else:
            kernel = _ffn_kernel_accum_scratch
            scratch_shapes = [pltpu.VMEM((tm, hidden), jnp.float32)]

    out2d = pl.pallas_call(
        kernel,
        out_shape=jax.ShapeDtypeStruct((m_pad, hidden), out_dtype),
        grid_spec=pltpu.PrefetchScalarGridSpec(
            num_scalar_prefetch=0,
            grid=grid,
            in_specs=in_specs,
            out_specs=out_specs,
            scratch_shapes=scratch_shapes,
        ),
        compiler_params=pltpu.CompilerParams(
            dimension_semantics=dim_sem,
            vmem_limit_bytes=vmem_limit),
        cost_estimate=cost,
    )(x2d, w1, b1_2d, w2, b2_2d)

    if m_pad != m:
        out2d = out2d[:m]
    return out2d.reshape(orig_shape)


def _gelu_ref(h):
    return 0.5 * h * (1.0 + jax.lax.erf(h / jnp.sqrt(2.0)))


if __name__ == "__main__":
    # Small, module-consistent shapes: (batch=2, seq=8, hidden=32), ffn_size=64.
    batch, seq, hidden, ffn = 2, 8, 32, 64
    key = jax.random.PRNGKey(0)
    kx, kw1, kb1, kw2, kb2 = jax.random.split(key, 5)

    x = jax.random.normal(kx, (batch, seq, hidden), dtype=jnp.float32)
    w1 = jax.random.normal(kw1, (hidden, ffn), dtype=jnp.float32) * (1.0 / math.sqrt(hidden))
    b1 = jax.random.normal(kb1, (ffn,), dtype=jnp.float32) * 0.01
    w2 = jax.random.normal(kw2, (ffn, hidden), dtype=jnp.float32) * (1.0 / math.sqrt(ffn))
    b2 = jax.random.normal(kb2, (hidden,), dtype=jnp.float32) * 0.01

    # 1) resident-weight path (ffn=64 is padded to 128, grid_f == 1), exact f32.
    out = jax.block_until_ready(feed_forward_network(x, w1, b1, w2, b2))
    ref = _gelu_ref(x @ w1 + b1) @ w2 + b2
    assert out.shape == ref.shape == (batch, seq, hidden)
    assert jnp.allclose(out, ref, atol=1e-5, rtol=1e-5), "mismatch (resident path)"

    # 2) tiled-ffn + ragged-row path, f32 output accumulates into the output block.
    ffn2 = 256
    kw3, kb3, kw4, kb4 = jax.random.split(kw2, 4)
    w1b = jax.random.normal(kw3, (hidden, ffn2), dtype=jnp.float32) * (1.0 / math.sqrt(hidden))
    b1b = jax.random.normal(kb3, (ffn2,), dtype=jnp.float32) * 0.01
    w2b = jax.random.normal(kw4, (ffn2, hidden), dtype=jnp.float32) * (1.0 / math.sqrt(ffn2))
    b2b = jax.random.normal(kb4, (hidden,), dtype=jnp.float32) * 0.01
    x2 = jax.random.normal(kx, (3, 5, hidden), dtype=jnp.float32)  # 15 rows -> padded to 16

    out2 = jax.block_until_ready(feed_forward_network(x2, w1b, b1b, w2b, b2b, block_ffn=128))
    ref2 = _gelu_ref(x2 @ w1b + b1b) @ w2b + b2b
    assert jnp.allclose(out2, ref2, atol=1e-4, rtol=1e-4), "mismatch (tiled ffn, f32 out)"

    # 3) ragged ffn (200 -> padded to 256) with a tiled ffn axis.
    ffn3 = 200
    w1c = jax.random.normal(kw3, (hidden, ffn3), dtype=jnp.float32) * (1.0 / math.sqrt(hidden))
    b1c = jax.random.normal(kb3, (ffn3,), dtype=jnp.float32) * 0.01
    w2c = jax.random.normal(kw4, (ffn3, hidden), dtype=jnp.float32) * (1.0 / math.sqrt(ffn3))
    out3 = jax.block_until_ready(feed_forward_network(x2, w1c, b1c, w2c, b2b, block_ffn=128))
    ref3 = _gelu_ref(x2 @ w1c + b1c) @ w2c + b2b
    assert jnp.allclose(out3, ref3, atol=1e-4, rtol=1e-4), "mismatch (ragged ffn)"

    # 4) bf16 MXU operands + bf16 output (f32 scratch accumulator path).
    x3 = x2.astype(jnp.bfloat16)
    out4 = jax.block_until_ready(feed_forward_network(
        x3, w1b, b1b, w2b, b2b, block_ffn=128, use_bf16_matmul=True))
    x3f = x3.astype(jnp.float32)
    ref4 = _gelu_ref(x3f @ w1b + b1b) @ w2b + b2b
    assert jnp.allclose(out4.astype(jnp.float32), ref4, atol=3e-2, rtol=3e-2), \
        "mismatch (bf16 path)"

    # TODO(synk): nn.Dropout is constructed but never applied in the reference
    # forward(), so no dropout is implemented here.
    print("KERNEL_OK")
</pallas_src>

<mosaic_0001>
module attributes {stable_mosaic.version = 11 : i64} {
  func.func @_ffn_kernel_resident(%arg0: i32, %arg1: memref<8x32xf32, #tpu.memory_space<vmem>>, %arg2: memref<32x128xf32, #tpu.memory_space<vmem>>, %arg3: memref<1x128xf32, #tpu.memory_space<vmem>>, %arg4: memref<128x32xf32, #tpu.memory_space<vmem>>, %arg5: memref<1x32xf32, #tpu.memory_space<vmem>>, %arg6: memref<8x32xf32, #tpu.memory_space<vmem>>) attributes {dimension_semantics = [#tpu.dimension_semantics<parallel>], iteration_bounds = array<i64: 2>, scalar_prefetch = 0 : i64, scratch_operands = 0 : i64, tpu.core_type = #tpu.core_type<tc>, window_params = [{transform_indices = @transform_0, window_bounds = array<i64: 8, 32>}, {pipeline_mode = #tpu.pipeline_mode<synchronous>, transform_indices = @transform_1, window_bounds = array<i64: 32, 128>}, {pipeline_mode = #tpu.pipeline_mode<synchronous>, transform_indices = @transform_2, window_bounds = array<i64: 1, 128>}, {pipeline_mode = #tpu.pipeline_mode<synchronous>, transform_indices = @transform_3, window_bounds = array<i64: 128, 32>}, {pipeline_mode = #tpu.pipeline_mode<synchronous>, transform_indices = @transform_4, window_bounds = array<i64: 1, 32>}, {transform_indices = @transform_5, window_bounds = array<i64: 8, 32>}]} {
    %c0 = arith.constant 0 : index
    %c0_0 = arith.constant 0 : index
    %0 = vector.load %arg1[%c0, %c0_0] : memref<8x32xf32, #tpu.memory_space<vmem>>, vector<8x32xf32>
    %c0_1 = arith.constant 0 : index
    %c0_2 = arith.constant 0 : index
    %1 = vector.load %arg2[%c0_1, %c0_2] : memref<32x128xf32, #tpu.memory_space<vmem>>, vector<32x128xf32>
    %cst = arith.constant dense<0.000000e+00> : vector<8x128xf32>
    %2 = tpu.matmul %0, %1, %cst {dimension_numbers = #tpu.dot_dimension_numbers<[1], [0], [0], [1], [0, 0, 1, 1], [], []>} : vector<8x32xf32>, vector<32x128xf32>, vector<8x128xf32> -> vector<8x128xf32>
    %c0_3 = arith.constant 0 : index
    %c0_4 = arith.constant 0 : index
    %3 = vector.load %arg3[%c0_3, %c0_4] : memref<1x128xf32, #tpu.memory_space<vmem>>, vector<1x128xf32>
    %4 = vector.broadcast %3 : vector<1x128xf32> to vector<8x128xf32>
    %5 = arith.addf %2, %4 : vector<8x128xf32>
    %cst_5 = arith.constant 5.000000e-01 : f32
    %6 = vector.broadcast %cst_5 : f32 to vector<8x128xf32>
    %7 = arith.mulf %6, %5 : vector<8x128xf32>
    %cst_6 = arith.constant 0.707106769 : f32
    %8 = vector.broadcast %cst_6 : f32 to vector<8x128xf32>
    %9 = arith.mulf %5, %8 : vector<8x128xf32>
    %10 = math.erf %9 : vector<8x128xf32>
    %cst_7 = arith.constant 1.000000e+00 : f32
    %11 = vector.broadcast %cst_7 : f32 to vector<8x128xf32>
    %12 = arith.addf %11, %10 : vector<8x128xf32>
    %13 = arith.mulf %7, %12 : vector<8x128xf32>
    %c0_8 = arith.constant 0 : index
    %c0_9 = arith.constant 0 : index
    %14 = vector.load %arg4[%c0_8, %c0_9] : memref<128x32xf32, #tpu.memory_space<vmem>>, vector<128x32xf32>
    %cst_10 = arith.constant dense<0.000000e+00> : vector<8x32xf32>
    %15 = tpu.matmul %13, %14, %cst_10 {dimension_numbers = #tpu.dot_dimension_numbers<[1], [0], [0], [1], [0, 0, 1, 1], [], []>} : vector<8x128xf32>, vector<128x32xf32>, vector<8x32xf32> -> vector<8x32xf32>
    %c0_11 = arith.constant 0 : index
    %c0_12 = arith.constant 0 : index
    %16 = vector.load %arg5[%c0_11, %c0_12] : memref<1x32xf32, #tpu.memory_space<vmem>>, vector<1x32xf32>
    %17 = vector.broadcast %16 : vector<1x32xf32> to vector<8x32xf32>
    %18 = arith.addf %15, %17 : vector<8x32xf32>
    %c0_13 = arith.constant 0 : index
    %c0_14 = arith.constant 0 : index
    %19 = vector.load %arg6[%c0_13, %c0_14] : memref<8x32xf32, #tpu.memory_space<vmem>>, vector<8x32xf32>
    tpu.vector_store %arg6[%c0_13, %c0_14], %18 {strides = array<i32>} : memref<8x32xf32, #tpu.memory_space<vmem>>, vector<8x32xf32>,
    return
  }
  func.func @transform_0(%arg0: i32) -> (i32, i32) {
    %c0_i32 = arith.constant 0 : i32
    %c0_i32_0 = arith.constant 0 : i32
    return %arg0, %c0_i32 : i32, i32
  }
  func.func @transform_1(%arg0: i32) -> (i32, i32) {
    %c0_i32 = arith.constant 0 : i32
    %c0_i32_0 = arith.constant 0 : i32
    %c0_i32_1 = arith.constant 0 : i32
    return %c0_i32, %c0_i32_0 : i32, i32
  }
  func.func @transform_2(%arg0: i32) -> (i32, i32) {
    %c0_i32 = arith.constant 0 : i32
    %c0_i32_0 = arith.constant 0 : i32
    %c0_i32_1 = arith.constant 0 : i32
    return %c0_i32, %c0_i32_0 : i32, i32
  }
  func.func @transform_3(%arg0: i32) -> (i32, i32) {
    %c0_i32 = arith.constant 0 : i32
    %c0_i32_0 = arith.constant 0 : i32
    %c0_i32_1 = arith.constant 0 : i32
    return %c0_i32, %c0_i32_0 : i32, i32
  }
  func.func @transform_4(%arg0: i32) -> (i32, i32) {
    %c0_i32 = arith.constant 0 : i32
    %c0_i32_0 = arith.constant 0 : i32
    %c0_i32_1 = arith.constant 0 : i32
    return %c0_i32, %c0_i32_0 : i32, i32
  }
  func.func @transform_5(%arg0: i32) -> (i32, i32) {
    %c0_i32 = arith.constant 0 : i32
    %c0_i32_0 = arith.constant 0 : i32
    return %arg0, %c0_i32 : i32, i32
  }
}

</mosaic_0001>

<llo_original>
// kernel: tpu_custom_call.1
$region0: #{tpu_custom_call.1}
  #allocation0 [shape = 'u32[]', space=smem, size = 0x4, offset = 0x4, fixed_abs, tag = 'smem constant byte address 0x4 - core index']
  #allocation1 [shape = 'u32[144,128]{1,0:T(1,128)}', space=vmem, size = 0x12000, scoped, tag = 'internal scratch']
  %s0 = inlined_call_operand.vmem [shape: f32[16,32], index: 0, kind: input, shape index: {}]
  %s1 = inlined_call_operand.vmem [shape: f32[32,128], index: 1, kind: input, shape index: {}]
  %s2 = inlined_call_operand.vmem [shape: f32[1,128], index: 2, kind: input, shape index: {}]
  %s3 = inlined_call_operand.vmem [shape: f32[128,32], index: 3, kind: input, shape index: {}]
  %s4 = inlined_call_operand.vmem [shape: f32[1,32], index: 4, kind: input, shape index: {}]
  %s5 = inlined_call_operand.hbm [shape: f32[16,32], index: 5, kind: output, shape index: {}]
  %s6 = sld [smem:[#allocation0]]
  $region53: #{tpu_custom_call.1} parent=0
    _
  %s8 = ssub.s32 1, %s6
  %s9 = scalar_select 0, %s8, %s6
  $region1: #{tpu_custom_call.1} parent=0
    #allocation2 [shape = 'u8[8192]{0}', space=vmem, size = 0x2000, scoped, tag = 'output window, operand 0']
    #allocation3 [shape = 's32[2]{0}', space=sflag, size = 0x8, scoped, tag = 'scoped memory for tpu_custom_call.1']
    %10 = vsyncpa [#allocation3], 0
    %s11 = scalar_lea.sflag [#allocation3], 1
    %12 = vsyncpa %s11, 0
    loop: start=0, step=1, limit=4
    $region2: #{tpu_custom_call.1} parent=1 // loop_pre_header
      _
    $region3: #{tpu_custom_call.1} parent=1 // loop_header
      %s14 = sphi 0, %s18
      %p15 = scmp.ge.s32.totalorder %s14, 4
      %s24 = sphi 0, %s26
      %s27 = sphi 0, %s24
      %s28 = sphi 0, %s27
      %s44 = sphi 0, %s28
      %s48 = sphi 0, %s48
      %s50 = sphi 0, %s48
      %s51 = sphi 0, %s50
      %s65 = sphi 0, %s51
      %s69 = sphi 0, %s69
      %s71 = sphi 0, %s69
      %s72 = sphi 0, %s71
      %s86 = sphi 0, %s72
      %s90 = sphi 0, %s90
      %s92 = sphi 0, %s90
      %s93 = sphi 0, %s92
      %s107 = sphi 0, %s93
      %s111 = sphi 0, %s111
      %s113 = sphi 0, %s111
      %s114 = sphi 0, %s113
      %s128 = sphi 0, %s114
      %s134 = sphi 0, %s136
      %s137 = sphi 0, %s134
      %s138 = sphi 0, %s137
      %s154 = sphi 0, %s138
    $region4: #{tpu_custom_call.1} parent=1 // loop_header_branch
      %17 = sbr.rel (%p15) target = $region8
    $region5: #{tpu_custom_call.1} parent=1 // loop_body
      %s19 = ssub.s32 %s14, 1
      %s20 = ssub.s32 %s14, 2
      %s21 = sadd.s32 %s14, 1
      %s22 = ssub.s32 %s14, %s21
      %p23 = scmp.eq.s32.totalorder %s22, 0
      %s25 = sadd.s32 %s24, 1
      %s26 = scalar_select %p23, %s24, %s25
      %p29 = pneg %p23
      %p30 = scmp.eq.s32.totalorder %s14, 1
      %p31 = por %p29, %p30
      %p32 = scmp.ne.s32.totalorder %s24, %s27
      %p33 = scmp.eq.s32.totalorder %s14, 0
      %p34 = por %p32, %p33
      %p35 = scmp.ne.s32.totalorder %s24, %s27
      %p36 = scmp.eq.s32.totalorder %s19, 1
      %p37 = por %p35, %p36
      %p38 = scmp.ne.s32.totalorder %s27, %s28
      %p39 = scmp.eq.s32.totalorder %s19, 0
      %p40 = por %p38, %p39
      %p41 = scmp.ne.s32.totalorder %s27, %s28
      %p42 = scmp.eq.s32.totalorder %s20, 1
      %p43 = por %p41, %p42
      %p45 = scmp.ne.s32.totalorder %s28, %s44
      %p46 = scmp.eq.s32.totalorder %s20, 0
      %p47 = por %p45, %p46
      %s49 = sadd.s32 %s48, 1
      %p52 = scmp.eq.s32.totalorder %s14, 1
      %p53 = scmp.ne.s32.totalorder %s48, %s50
      %p54 = scmp.eq.s32.totalorder %s14, 0
      %p55 = por %p53, %p54
      %p56 = scmp.ne.s32.totalorder %s48, %s50
      %p57 = scmp.eq.s32.totalorder %s19, 1
      %p58 = por %p56, %p57
      %p59 = scmp.ne.s32.totalorder %s50, %s51
      %p60 = scmp.eq.s32.totalorder %s19, 0
      %p61 = por %p59, %p60
      %p62 = scmp.ne.s32.totalorder %s50, %s51
      %p63 = scmp.eq.s32.totalorder %s20, 1
      %p64 = por %p62, %p63
      %p66 = scmp.ne.s32.totalorder %s51, %s65
      %p67 = scmp.eq.s32.totalorder %s20, 0
      %p68 = por %p66, %p67
      %s70 = sadd.s32 %s69, 1
      %p73 = scmp.eq.s32.totalorder %s14, 1
      %p74 = scmp.ne.s32.totalorder %s69, %s71
      %p75 = scmp.eq.s32.totalorder %s14, 0
      %p76 = por %p74, %p75
      %p77 = scmp.ne.s32.totalorder %s69, %s71
      %p78 = scmp.eq.s32.totalorder %s19, 1
      %p79 = por %p77, %p78
      %p80 = scmp.ne.s32.totalorder %s71, %s72
      %p81 = scmp.eq.s32.totalorder %s19, 0
      %p82 = por %p80, %p81
      %p83 = scmp.ne.s32.totalorder %s71, %s72
      %p84 = scmp.eq.s32.totalorder %s20, 1
      %p85 = por %p83, %p84
      %p87 = scmp.ne.s32.totalorder %s72, %s86
      %p88 = scmp.eq.s32.totalorder %s20, 0
      %p89 = por %p87, %p88
      %s91 = sadd.s32 %s90, 1
      %p94 = scmp.eq.s32.totalorder %s14, 1
      %p95 = scmp.ne.s32.totalorder %s90, %s92
      %p96 = scmp.eq.s32.totalorder %s14, 0
      %p97 = por %p95, %p96
      %p98 = scmp.ne.s32.totalorder %s90, %s92
      %p99 = scmp.eq.s32.totalorder %s19, 1
      %p100 = por %p98, %p99
      %p101 = scmp.ne.s32.totalorder %s92, %s93
      %p102 = scmp.eq.s32.totalorder %s19, 0
      %p103 = por %p101, %p102
      %p104 = scmp.ne.s32.totalorder %s92, %s93
      %p105 = scmp.eq.s32.totalorder %s20, 1
      %p106 = por %p104, %p105
      %p108 = scmp.ne.s32.totalorder %s93, %s107
      %p109 = scmp.eq.s32.totalorder %s20, 0
      %p110 = por %p108, %p109
      %s112 = sadd.s32 %s111, 1
      %p115 = scmp.eq.s32.totalorder %s14, 1
      %p116 = scmp.ne.s32.totalorder %s111, %s113
      %p117 = scmp.eq.s32.totalorder %s14, 0
      %p118 = por %p116, %p117
      %p119 = scmp.ne.s32.totalorder %s111, %s113
      %p120 = scmp.eq.s32.totalorder %s19, 1
      %p121 = por %p119, %p120
      %p122 = scmp.ne.s32.totalorder %s113, %s114
      %p123 = scmp.eq.s32.totalorder %s19, 0
      %p124 = por %p122, %p123
      %p125 = scmp.ne.s32.totalorder %s113, %s114
      %p126 = scmp.eq.s32.totalorder %s20, 1
      %p127 = por %p125, %p126
      %p129 = scmp.ne.s32.totalorder %s114, %s128
      %p130 = scmp.eq.s32.totalorder %s20, 0
      %p131 = por %p129, %p130
      %s132 = ssub.s32 %s14, %s21
      %p133 = scmp.eq.s32.totalorder %s132, 0
      %s135 = sadd.s32 %s134, 1
      %s136 = scalar_select %p133, %s134, %s135
      %p139 = pneg %p133
      %p140 = scmp.eq.s32.totalorder %s14, 1
      %p141 = por %p139, %p140
      %p142 = scmp.ne.s32.totalorder %s134, %s137
      %p143 = scmp.eq.s32.totalorder %s14, 0
      %p144 = por %p142, %p143
      %p145 = scmp.ne.s32.totalorder %s134, %s137
      %p146 = scmp.eq.s32.totalorder %s19, 1
      %p147 = por %p145, %p146
      %p148 = scmp.ne.s32.totalorder %s137, %s138
      %p149 = scmp.eq.s32.totalorder %s19, 0
      %p150 = por %p148, %p149
      %p151 = scmp.ne.s32.totalorder %s137, %s138
      %p152 = scmp.eq.s32.totalorder %s20, 1
      %p153 = por %p151, %p152
      %p155 = scmp.ne.s32.totalorder %s138, %s154
      %p156 = scmp.eq.s32.totalorder %s20, 0
      %p157 = por %p155, %p156
      %p158 = scmp.le.s32.totalorder 1, %s14
      %p159 = scmp.lt.s32.totalorder %s14, 3
      %p160 = pnand %p158, %p159
      %p161 = pneg %p160
      // Predicated region
      $region9: #{tpu_custom_call.1} parent=5 // pred_check
        _
      $region10: #{tpu_custom_call.1} parent=5 // pred_check_branch
        %163 = sbr.rel (%p160) target = $region12
      $region11: #{tpu_custom_call.1} parent=5 // pred_region
        %s164 = ssub.s32 %s14, 1
        // Predicated region
        $region13: #{tpu_custom_call.1} parent=11 // pred_check
          %p165 = pneg %p61
        $region14: #{tpu_custom_call.1} parent=11 // pred_check_branch
          %167 = sbr.rel (%p165) target = $region16
        $region15: #{tpu_custom_call.1} parent=11 // pred_region
          _
        $region16: #{tpu_custom_call.1} parent=11 // pred_fallthru
          _
        // Predicated region
        $region17: #{tpu_custom_call.1} parent=11 // pred_check
          %p168 = pneg %p82
        $region18: #{tpu_custom_call.1} parent=11 // pred_check_branch
          %170 = sbr.rel (%p168) target = $region20
        $region19: #{tpu_custom_call.1} parent=11 // pred_region
          _
        $region20: #{tpu_custom_call.1} parent=11 // pred_fallthru
          _
        // Predicated region
        $region21: #{tpu_custom_call.1} parent=11 // pred_check
          %p171 = pneg %p103
        $region22: #{tpu_custom_call.1} parent=11 // pred_check_branch
          %173 = sbr.rel (%p171) target = $region24
        $region23: #{tpu_custom_call.1} parent=11 // pred_region
          _
        $region24: #{tpu_custom_call.1} parent=11 // pred_fallthru
          _
        // Predicated region
        $region25: #{tpu_custom_call.1} parent=11 // pred_check
          %p174 = pneg %p124
        $region26: #{tpu_custom_call.1} parent=11 // pred_check_branch
          %176 = sbr.rel (%p174) target = $region28
        $region27: #{tpu_custom_call.1} parent=11 // pred_region
          _
        $region28: #{tpu_custom_call.1} parent=11 // pred_fallthru
          _
      $region12: #{tpu_custom_call.1} parent=5 // pred_fallthru
        _
      %p177 = scmp.lt.s32.totalorder %s14, 2
      // Predicated region
      $region29: #{tpu_custom_call.1} parent=5 // pred_check
        %p178 = pneg %p177
      $region30: #{tpu_custom_call.1} parent=5 // pred_check_branch
        %180 = sbr.rel (%p178) target = $region32
      $region31: #{tpu_custom_call.1} parent=5 // pred_region
        // Predicated region
        $region33: #{tpu_custom_call.1} parent=31 // pred_check
          %p181 = pneg %p34
        $region34: #{tpu_custom_call.1} parent=31 // pred_check_branch
          %183 = sbr.rel (%p181) target = $region36
        $region35: #{tpu_custom_call.1} parent=31 // pred_region
          %p184 = scmp.lt.s32.totalorder %s14, 1
          %s185 = scalar_select %p184, %s14, 1
          %s186 = smul.addr %s185, 8
          %s187 = scalar_lea.vmem %s0, %s186
        $region36: #{tpu_custom_call.1} parent=31 // pred_fallthru
          _
      $region32: #{tpu_custom_call.1} parent=5 // pred_fallthru
        _
      %p188 = scmp.le.s32.totalorder 1, %s14
      %p189 = scmp.lt.s32.totalorder %s14, 3
      %p190 = pnand %p188, %p189
      %p191 = pneg %p190
      // Predicated region
      $region37: #{tpu_custom_call.1} parent=5 // pred_check
        _
      $region38: #{tpu_custom_call.1} parent=5 // pred_check_branch
        %193 = sbr.rel (%p190) target = $region40
      $region39: #{tpu_custom_call.1} parent=5 // pred_region
        %s194 = ssub.s32 %s14, 1
        %p195 = scmp.lt.s32.totalorder %s19, 1
        %s196 = scalar_select %p195, %s19, 1
        %s197 = smul.addr %s196, 8
        %s198 = scalar_lea.vmem %s0, %s197
        %p199 = pneg %p40
        %p200 = pneg %p37
        %p201 = pneg %p61
        %p202 = pneg %p58
        %p203 = pneg %p82
        %p204 = pneg %p79
        %p205 = pneg %p103
        %p206 = pneg %p100
        %p207 = pneg %p124
        %p208 = pneg %p121
        %p209 = pneg %p150
        %p210 = pneg %p147
        %s211 = sand.u32 %s137, 1
        %s212 = scalar_lea.sflag [#allocation3], %s211
        %s213 = sand.u32 %s137, 1
        %s214 = smul.addr %s213, 8
        %s215 = scalar_lea.vmem [#allocation2], %s214
        %p216 = scmp.lt.s32.totalorder %s19, 1
        %s217 = scalar_select %p216, %s19, 1
        %s218 = smul.addr %s217, 8
        %s219 = scalar_lea.vmem %s0, %s218
        %v220 = vld [vmem:[%s219] sm:$0xff]
        %v221 = vld [vmem:[%s1] sm:$0xff]
        %v222 = vld [vmem:[%s1 + $0x8] sm:$0xff]
        %v223 = vld [vmem:[%s1 + $0x10] sm:$0xff]
        %v224 = vld [vmem:[%s1 + $0x18] sm:$0xff]
        %v225 = vld [vmem:[%s2] sm:$0x1]
        %v227 = vlaneseq
        %v228 = vshrl.u32 %v227, 7
        %v229 = vsub.s32 0, %v228
        %v230 = vrot.slane %v225, %v229
        %vm232 = vcmask 261120
        %v234 = vsel %vm232, %v220, 0
        %236 = vmatprep.subr.mxu0 0.0
        %237 = vmatpush1.msra.mxu0 %v221
        %238 = vmatprep.subr.mxu0 0.0
        %239 = vmatpush1.msra.mxu0 %v222
        %240 = vmatprep.subr.mxu0 0.0
        %241 = vmatpush1.msra.mxu0 %v223
        %242 = vmatprep.subr.mxu0 0.0
        %243 = vmatpush1.msra.mxu0 %v224
        %244 = vmatprep.subr.mxu0 0.0
        %245 = vmatpush1.msra.mxu0 0.0
        %246 = vmatprep.subr.mxu0 0.0
        %247 = vmatpush1.msra.mxu0 0.0
        %248 = vmatprep.subr.mxu0 0.0
        %249 = vmatpush1.msra.mxu0 0.0
        %250 = vmatprep.subr.mxu0 0.0
        %251 = vmatpush1.msra.mxu0 0.0
        %252 = vmatprep.subr.mxu0 0.0
        %253 = vmatpush1.msra.mxu0 0.0
        %254 = vmatprep.subr.mxu0 0.0
        %255 = vmatpush1.msra.mxu0 0.0
        %256 = vmatprep.subr.mxu0 0.0
        %257 = vmatpush1.msra.mxu0 0.0
        %258 = vmatprep.subr.mxu0 0.0
        %259 = vmatpush1.msra.mxu0 0.0
        %260 = vmatprep.subr.mxu0 0.0
        %261 = vmatpush1.msra.mxu0 0.0
        %262 = vmatprep.subr.mxu0 0.0
        %263 = vmatpush1.msra.mxu0 0.0
        %264 = vmatprep.subr.mxu0 0.0
        %265 = vmatpush1.msra.mxu0 0.0
        %266 = vmatprep.subr.mxu0 0.0
        %267 = vmatpush1.msra.mxu0 0.0
        %268 = vmatprep.subr.mxu0 0.0
        %269 = vmatpush1.msra.mxu0 0.0
        %270 = vmatprep.subr.mxu0 0.0
        %271 = vmatpush1.msra.mxu0 0.0
        %272 = vmatprep.subr.mxu0 0.0
        %273 = vmatpush1.msra.mxu0 0.0
        %274 = vmatprep.subr.mxu0 0.0
        %275 = vmatpush1.msra.mxu0 0.0
        %276 = vmatprep.subr.mxu0 0.0
        %277 = vmatpush1.msra.mxu0 0.0
        %278 = vmatprep.subr.mxu0 0.0
        %279 = vmatpush1.msra.mxu0 0.0
        %280 = vmatprep.subr.mxu0 0.0
        %281 = vmatpush1.msra.mxu0 0.0
        %282 = vmatprep.subr.mxu0 0.0
        %283 = vmatpush1.msra.mxu0 0.0
        %284 = vmatprep.subr.mxu0 0.0
        %285 = vmatpush1.msra.mxu0 0.0
        %286 = vmatprep.subr.mxu0 0.0
        %287 = vmatpush1.msra.mxu0 0.0
        %288 = vmatprep.subr.mxu0 0.0
        %289 = vmatpush1.msra.mxu0 0.0
        %290 = vmatprep.subr.mxu0 0.0
        %291 = vmatpush1.msra.mxu0 0.0
        %292 = vmatprep.subr.mxu0 0.0
        %293 = vmatpush1.msra.mxu0 0.0
        %294 = vmatprep.subr.mxu0 0.0
        %295 = vmatpush1.msra.mxu0 0.0
        %296 = vmatprep.subr.mxu0 0.0
        %297 = vmatpush1.msra.mxu0 0.0
        %298 = vmatprep.subr.mxu0 0.0
        %299 = vmatpush1.msra.mxu0 0.0
        %300 = vmatprep.mubr.f32.mxu0 0.0
        %301 = vmatmul.mubr.f32.gmra.mrb[0].mxu0 %v234
        %v302 = vpop.f32.mrb[0].mxu0
        %v303 = vadd.f32 %v230, %v302
        %v304 = vpop.f32.mrb[0].mxu0
        %305 = vdwg.mxu0
        %v306 = vmul.f32 %v303, 0.5
        %v307 = vmul.f32 %v303, 0.70710677
        %v308 = verf.f32.pop %v307
        %v309 = vadd.f32 %v308, 1.0
        %v310 = vmul.f32 %v306, %v309
        %v311 = vld [vmem:[%s3] sm:$0xff]
        %v312 = vld [vmem:[%s3 + $0x8] sm:$0xff]
        %v313 = vld [vmem:[%s3 + $0x10] sm:$0xff]
        %v314 = vld [vmem:[%s3 + $0x18] sm:$0xff]
        %v315 = vld [vmem:[%s3 + $0x20] sm:$0xff]
        %v316 = vld [vmem:[%s3 + $0x28] sm:$0xff]
        %v317 = vld [vmem:[%s3 + $0x30] sm:$0xff]
        %v318 = vld [vmem:[%s3 + $0x38] sm:$0xff]
        %v319 = vld [vmem:[%s3 + $0x40] sm:$0xff]
        %v320 = vld [vmem:[%s3 + $0x48] sm:$0xff]
        %v321 = vld [vmem:[%s3 + $0x50] sm:$0xff]
        %v322 = vld [vmem:[%s3 + $0x58] sm:$0xff]
        %v323 = vld [vmem:[%s3 + $0x60] sm:$0xff]
        %v324 = vld [vmem:[%s3 + $0x68] sm:$0xff]
        %v325 = vld [vmem:[%s3 + $0x70] sm:$0xff]
        %v326 = vld [vmem:[%s3 + $0x78] sm:$0xff]
        %v327 = vld [vmem:[%s4] sm:$0x1]
        %v329 = vlaneseq
        %v330 = vshrl.u32 %v329, 7
        %v331 = vsub.s32 0, %v330
        %v332 = vrot.slane %v327, %v331
        %334 = vmatprep.subr.mxu0 0.0
        %335 = vmatpush1.msra.mxu0 %v311
        %336 = vmatprep.subr.mxu0 0.0
        %337 = vmatpush1.msra.mxu0 %v312
        %338 = vmatprep.subr.mxu0 0.0
        %339 = vmatpush1.msra.mxu0 %v313
        %340 = vmatprep.subr.mxu0 0.0
        %341 = vmatpush1.msra.mxu0 %v314
        %342 = vmatprep.subr.mxu0 0.0
        %343 = vmatpush1.msra.mxu0 %v315
        %344 = vmatprep.subr.mxu0 0.0
        %345 = vmatpush1.msra.mxu0 %v316
        %346 = vmatprep.subr.mxu0 0.0
        %347 = vmatpush1.msra.mxu0 %v317
        %348 = vmatprep.subr.mxu0 0.0
        %349 = vmatpush1.msra.mxu0 %v318
        %350 = vmatprep.subr.mxu0 0.0
        %351 = vmatpush1.msra.mxu0 %v319
        %352 = vmatprep.subr.mxu0 0.0
        %353 = vmatpush1.msra.mxu0 %v320
        %354 = vmatprep.subr.mxu0 0.0
        %355 = vmatpush1.msra.mxu0 %v321
        %356 = vmatprep.subr.mxu0 0.0
        %357 = vmatpush1.msra.mxu0 %v322
        %358 = vmatprep.subr.mxu0 0.0
        %359 = vmatpush1.msra.mxu0 %v323
        %360 = vmatprep.subr.mxu0 0.0
        %361 = vmatpush1.msra.mxu0 %v324
        %362 = vmatprep.subr.mxu0 0.0
        %363 = vmatpush1.msra.mxu0 %v325
        %364 = vmatprep.subr.mxu0 0.0
        %365 = vmatpush1.msra.mxu0 %v326
        %366 = vmatprep.subr.mxu0 0.0
        %367 = vmatpush1.msra.mxu0 0.0
        %368 = vmatprep.subr.mxu0 0.0
        %369 = vmatpush1.msra.mxu0 0.0
        %370 = vmatprep.subr.mxu0 0.0
        %371 = vmatpush1.msra.mxu0 0.0
        %372 = vmatprep.subr.mxu0 0.0
        %373 = vmatpush1.msra.mxu0 0.0
        %374 = vmatprep.subr.mxu0 0.0
        %375 = vmatpush1.msra.mxu0 0.0
        %376 = vmatprep.subr.mxu0 0.0
        %377 = vmatpush1.msra.mxu0 0.0
        %378 = vmatprep.subr.mxu0 0.0
        %379 = vmatpush1.msra.mxu0 0.0
        %380 = vmatprep.subr.mxu0 0.0
        %381 = vmatpush1.msra.mxu0 0.0
        %382 = vmatprep.subr.mxu0 0.0
        %383 = vmatpush1.msra.mxu0 0.0
        %384 = vmatprep.subr.mxu0 0.0
        %385 = vmatpush1.msra.mxu0 0.0
        %386 = vmatprep.subr.mxu0 0.0
        %387 = vmatpush1.msra.mxu0 0.0
        %388 = vmatprep.subr.mxu0 0.0
        %389 = vmatpush1.msra.mxu0 0.0
        %390 = vmatprep.subr.mxu0 0.0
        %391 = vmatpush1.msra.mxu0 0.0
        %392 = vmatprep.subr.mxu0 0.0
        %393 = vmatpush1.msra.mxu0 0.0
        %394 = vmatprep.subr.mxu0 0.0
        %395 = vmatpush1.msra.mxu0 0.0
        %396 = vmatprep.subr.mxu0 0.0
        %397 = vmatpush1.msra.mxu0 0.0
        %398 = vmatprep.mubr.f32.mxu0 0.0
        %399 = vmatmul.mubr.f32.gmra.mrb[0].mxu0 %v310
        %v400 = vpop.f32.mrb[0].mxu0
        %v401 = vadd.f32 %v332, %v400
        %v402 = vpop.f32.mrb[0].mxu0
        %403 = vdwg.mxu0
        %404 = vst.msk [vmem:[%s215] sm:$0xff] %vm232, %v401
        %s405 = sand.u32 %s137, 1
        %s406 = scalar_lea.sflag [#allocation3], %s405
        %s407 = sand.u32 %s137, 1
        %s408 = smul.addr %s407, 8
        %s409 = scalar_lea.vmem [#allocation2], %s408
        // Predicated region
        $region41: #{tpu_custom_call.1} parent=39 // pred_check
          %p410 = pneg %p147
        $region42: #{tpu_custom_call.1} parent=39 // pred_check_branch
          %412 = sbr.rel (%p410) target = $region44
        $region43: #{tpu_custom_call.1} parent=39 // pred_region
          %s414 = ssub.s32 128, 128
          %415 = vsyncadd %s406, %s414
          %s416 = smul.addr %s19, 128
          %s417 = scalar_lea.hbm %s5, %s416
          %s419 = sshll.u32 %s409, 4
          %s420 = int_to_ptr.vmem [resolvable:$true] %s419
          %422 = dma.vmem_to_hbm [thread:$0]  %s420, 128, %s417, %s406
        $region44: #{tpu_custom_call.1} parent=39 // pred_fallthru
          _
      $region40: #{tpu_custom_call.1} parent=5 // pred_fallthru
        _
      %p423 = scmp.le.s32.totalorder 2, %s14
      // Predicated region
      $region45: #{tpu_custom_call.1} parent=5 // pred_check
        %p424 = pneg %p423
      $region46: #{tpu_custom_call.1} parent=5 // pred_check_branch
        %426 = sbr.rel (%p424) target = $region48
      $region47: #{tpu_custom_call.1} parent=5 // pred_region
        %s427 = ssub.s32 %s14, 2
        // Predicated region
        $region49: #{tpu_custom_call.1} parent=47 // pred_check
          %p428 = pneg %p153
        $region50: #{tpu_custom_call.1} parent=47 // pred_check_branch
          %430 = sbr.rel (%p428) target = $region52
        $region51: #{tpu_custom_call.1} parent=47 // pred_region
          %s431 = sand.u32 %s138, 1
          %s432 = scalar_lea.sflag [#allocation3], %s431
          %s433 = sand.u32 %s138, 1
          %s434 = smul.addr %s433, 8
          %s435 = scalar_lea.vmem [#allocation2], %s434
          %436 = dma.done %s432, 128
        $region52: #{tpu_custom_call.1} parent=47 // pred_fallthru
          _
      $region48: #{tpu_custom_call.1} parent=5 // pred_fallthru
        _
    $region6: #{tpu_custom_call.1} parent=1 // loop_footer
      %s18 = sadd.s32 1, %s14
    $region7: #{tpu_custom_call.1} parent=1 // loop_footer_branch
      %13 = sbr.rel target = $region3
    $region8: #{tpu_custom_call.1} parent=1 // loop_exit
      _
    %437 = vsyncpa [#allocation3], 1
    %s438 = scalar_lea.sflag [#allocation3], 1
    %439 = vsyncpa %s438, 1

</llo_original>
